<compile_context>
chip_gen: v7x
topology: tpu7x:2x2x1
jax: 0.10.0
libtpu: 0.0.40
codegen_flags: <defaults>
</compile_context>

<pallas_src>
import functools
from typing import Sequence

import jax
import jax.numpy as jnp
from jax.experimental import pallas as pl
from jax.experimental.pallas import tpu as pltpu

_LANE = 128          # lane width (last dim)
_SUBLANE_BF16 = 16   # bf16 packs 16 rows per vreg, keep batch tiles 16-aligned


def _round_up(v: int, m: int) -> int:
    return ((v + m - 1) // m) * m


def _mlp_fused_kernel(x_ref, *refs, n_linear, relu_flags, ln_flags, real_dims, eps):
    """Whole MLP in one kernel; activations stay resident between layers.

    refs layout: (w0, b0, g0, be0, w1, b1, g1, be1, ..., out_ref)
    All static config (flags, dims, eps) is bound via functools.partial, so the
    branches below are resolved at trace time (no runtime control flow).
    """
    o_ref = refs[-1]
    params = refs[:-1]

    h = x_ref[...]  # (TB, D0_pad) bf16
    for i in range(n_linear):
        w_ref, b_ref, g_ref, be_ref = params[4 * i: 4 * i + 4]

        # bf16 MXU matmul with f32 accumulation (no-op cast on the first layer).
        y = jnp.dot(h.astype(jnp.bfloat16), w_ref[...],
                    preferred_element_type=jnp.float32)
        y = y + b_ref[...]           # (1, Dout_pad) broadcasts over rows

        if relu_flags[i]:
            y = jnp.maximum(y, 0.0)

        if ln_flags[i]:
            # Padded columns of y are exactly 0 (zero-padded W, b), so sums over
            # the padded axis equal sums over the real columns; normalize by the
            # REAL feature width.
            inv_d = 1.0 / float(real_dims[i + 1])
            s1 = jnp.sum(y, axis=-1, keepdims=True)
            s2 = jnp.sum(y * y, axis=-1, keepdims=True)
            mean = s1 * inv_d
            var = s2 * inv_d - mean * mean
            inv = jax.lax.rsqrt(var + eps)
            # gamma/beta are zero-padded -> padded columns remain exactly 0.
            y = (y - mean) * inv * g_ref[...] + be_ref[...]

        h = y

    o_ref[...] = h.astype(o_ref.dtype)


def _mlp_forward(x2, flat_params, *, n_linear, relu_flags, ln_flags,
                 real_dims, pad_dims, eps):
    """Pad, run the fused Pallas kernel over batch tiles, slice back. (jit'ed)"""
    B, D0 = x2.shape
    D0_pad = pad_dims[0]
    DL, DL_pad = real_dims[-1], pad_dims[-1]

    # Batch tiling: bf16-sublane aligned, capped at 512 rows per tile.
    TB = min(512, _round_up(B, _SUBLANE_BF16))
    B_pad = _round_up(B, TB)

    # Lane-dense, zero-padded bf16 activation slab.
    x_pad = (jnp.zeros((B_pad, D0_pad), jnp.bfloat16)
             .at[:B, :D0].set(x2.astype(jnp.bfloat16)))

    kernel = functools.partial(
        _mlp_fused_kernel,
        n_linear=n_linear,
        relu_flags=relu_flags,
        ln_flags=ln_flags,
        real_dims=real_dims,
        eps=eps)

    in_specs = [pl.BlockSpec((TB, D0_pad), lambda i: (i, 0))]
    for li in range(n_linear):
        w_pad = flat_params[4 * li]
        dinp, doutp = w_pad.shape
        # Weights/bias/gamma/beta: same block for every grid step -> stay resident.
        in_specs.append(pl.BlockSpec((dinp, doutp), lambda i: (0, 0)))
        in_specs.append(pl.BlockSpec((1, doutp), lambda i: (0, 0)))
        in_specs.append(pl.BlockSpec((1, doutp), lambda i: (0, 0)))
        in_specs.append(pl.BlockSpec((1, doutp), lambda i: (0, 0)))

    flops = sum(2 * B_pad * pad_dims[i] * pad_dims[i + 1] for i in range(n_linear))
    transcendentals = B_pad * sum(1 for f in ln_flags if f)
    bytes_accessed = (x_pad.size * 2 + B_pad * DL_pad * 4 +
                      sum(int(p.size) * p.dtype.itemsize for p in flat_params))

    out = pl.pallas_call(
        kernel,
        out_shape=jax.ShapeDtypeStruct((B_pad, DL_pad), jnp.float32),
        grid_spec=pltpu.PrefetchScalarGridSpec(
            num_scalar_prefetch=0,
            grid=(B_pad // TB,),
            in_specs=in_specs,
            out_specs=pl.BlockSpec((TB, DL_pad), lambda i: (i, 0)),
        ),
        compiler_params=pltpu.CompilerParams(
            dimension_semantics=("parallel",)),
        cost_estimate=pl.CostEstimate(
            flops=flops,
            transcendentals=transcendentals,
            bytes_accessed=bytes_accessed),
    )(x_pad, *flat_params)

    return out[:B, :DL]


class PallasMLP:
    """Mirrors the PyTorch MLP (Linear -> ReLU -> optional LayerNorm) forward."""

    def __init__(self, hidden_dims: Sequence[int], activate_final: bool = False,
                 layer_norm: bool = False, key=None, eps: float = 1e-5):
        if key is None:
            key = jax.random.PRNGKey(0)
        self.real_dims = list(hidden_dims)
        self.pad_dims = [_round_up(d, _LANE) for d in hidden_dims]
        self.eps = eps
        n_linear = len(hidden_dims) - 1
        self.n_linear = n_linear
        self.relu_flags = tuple((i < n_linear - 1) or activate_final
                                for i in range(n_linear))
        self.ln_flags = tuple(f and layer_norm for f in self.relu_flags)

        self.params_f32 = []   # unpadded f32 params (for references)
        self.params_pad = []   # lane-padded params; weights in bf16
        for i in range(n_linear):
            din, dout = hidden_dims[i], hidden_dims[i + 1]
            dinp, doutp = self.pad_dims[i], self.pad_dims[i + 1]
            key, kw, kb = jax.random.split(key, 3)
            # PyTorch nn.Linear default init: U(-1/sqrt(din), 1/sqrt(din))
            bound = 1.0 / (din ** 0.5)
            w = jax.random.uniform(kw, (din, dout), jnp.float32, -bound, bound)
            b = jax.random.uniform(kb, (dout,), jnp.float32, -bound, bound)
            gamma = jnp.ones((dout,), jnp.float32)   # nn.LayerNorm default
            beta = jnp.zeros((dout,), jnp.float32)
            self.params_f32.append((w, b, gamma, beta))

            w_pad = (jnp.zeros((dinp, doutp), jnp.float32)
                     .at[:din, :dout].set(w).astype(jnp.bfloat16))
            b_pad = jnp.zeros((1, doutp), jnp.float32).at[0, :dout].set(b)
            g_pad = jnp.zeros((1, doutp), jnp.float32).at[0, :dout].set(gamma)
            be_pad = jnp.zeros((1, doutp), jnp.float32).at[0, :dout].set(beta)
            self.params_pad.append((w_pad, b_pad, g_pad, be_pad))

        self._flat_params = tuple(p for layer in self.params_pad for p in layer)
        self._forward = jax.jit(functools.partial(
            _mlp_forward,
            n_linear=self.n_linear,
            relu_flags=self.relu_flags,
            ln_flags=self.ln_flags,
            real_dims=tuple(self.real_dims),
            pad_dims=tuple(self.pad_dims),
            eps=self.eps))

    def __call__(self, x):
        lead = x.shape[:-1]
        D0 = x.shape[-1]
        x2 = x.reshape(-1, D0).astype(jnp.float32)
        out2 = self._forward(x2, self._flat_params)
        return out2.reshape(*lead, self.real_dims[-1])

    # ---- references -------------------------------------------------------

    def reference_f32(self, x):
        """Pure-JAX f32 reference matching PyTorch semantics exactly."""
        h = x
        for i, (w, b, gamma, beta) in enumerate(self.params_f32):
            h = h @ w + b
            if self.relu_flags[i]:
                h = jnp.maximum(h, 0.0)
            if self.ln_flags[i]:
                mean = jnp.mean(h, axis=-1, keepdims=True)
                var = jnp.mean((h - mean) ** 2, axis=-1, keepdims=True)
                h = (h - mean) * jax.lax.rsqrt(var + self.eps) * gamma + beta
        return h

    def reference_mirror(self, x):
        """Reference mirroring the kernel's precision path (bf16 matmul, f32 epilogue)."""
        h = x.astype(jnp.float32)
        for i, (w, b, gamma, beta) in enumerate(self.params_f32):
            y = jnp.dot(h.astype(jnp.bfloat16), w.astype(jnp.bfloat16),
                        preferred_element_type=jnp.float32) + b
            if self.relu_flags[i]:
                y = jnp.maximum(y, 0.0)
            if self.ln_flags[i]:
                d = float(self.real_dims[i + 1])
                mean = jnp.sum(y, axis=-1, keepdims=True) / d
                var = jnp.sum(y * y, axis=-1, keepdims=True) / d - mean * mean
                y = (y - mean) * jax.lax.rsqrt(var + self.eps) * gamma + beta
            h = y
        return h


if __name__ == "__main__":
    key = jax.random.PRNGKey(0)
    kx, kp = jax.random.split(key)

    hidden_dims = [32, 64, 48, 16]   # input dim 32, two hidden layers, output 16
    batch = 8
    x = jax.random.normal(kx, (batch, hidden_dims[0]), jnp.float32)

    mlp = PallasMLP(hidden_dims, activate_final=False, layer_norm=True, key=kp)

    out = mlp(x)
    out = jax.block_until_ready(out)
    assert out.shape == (batch, hidden_dims[-1])

    # Tight check vs. a reference that mirrors the kernel's bf16-matmul precision.
    ref_m = mlp.reference_mirror(x)
    assert jnp.allclose(out, ref_m, atol=1e-3, rtol=1e-3), "mismatch vs mirrored reference"

    # Loose check vs. the pure-f32 PyTorch-semantics reference (bf16 matmul noise).
    ref_f = mlp.reference_f32(x)
    assert jnp.allclose(out, ref_f, atol=5e-2, rtol=5e-2), "mismatch vs f32 reference"

    print("KERNEL_OK")
</pallas_src>

<mosaic_0001>
module attributes {stable_mosaic.version = 11 : i64} {
  func.func @_mlp_fused_kernel(%arg0: i32, %arg1: memref<16x128xbf16, #tpu.memory_space<vmem>>, %arg2: memref<128x128xbf16, #tpu.memory_space<vmem>>, %arg3: memref<1x128xf32, #tpu.memory_space<vmem>>, %arg4: memref<1x128xf32, #tpu.memory_space<vmem>>, %arg5: memref<1x128xf32, #tpu.memory_space<vmem>>, %arg6: memref<128x128xbf16, #tpu.memory_space<vmem>>, %arg7: memref<1x128xf32, #tpu.memory_space<vmem>>, %arg8: memref<1x128xf32, #tpu.memory_space<vmem>>, %arg9: memref<1x128xf32, #tpu.memory_space<vmem>>, %arg10: memref<128x128xbf16, #tpu.memory_space<vmem>>, %arg11: memref<1x128xf32, #tpu.memory_space<vmem>>, %arg12: memref<1x128xf32, #tpu.memory_space<vmem>>, %arg13: memref<1x128xf32, #tpu.memory_space<vmem>>, %arg14: memref<16x128xf32, #tpu.memory_space<vmem>>) attributes {dimension_semantics = [#tpu.dimension_semantics<parallel>], iteration_bounds = array<i64: 1>, scalar_prefetch = 0 : i64, scratch_operands = 0 : i64, tpu.core_type = #tpu.core_type<tc>, window_params = [{transform_indices = @transform_0, window_bounds = array<i64: 16, 128>}, {pipeline_mode = #tpu.pipeline_mode<synchronous>, transform_indices = @transform_1, window_bounds = array<i64: 128, 128>}, {pipeline_mode = #tpu.pipeline_mode<synchronous>, transform_indices = @transform_2, window_bounds = array<i64: 1, 128>}, {pipeline_mode = #tpu.pipeline_mode<synchronous>, transform_indices = @transform_3, window_bounds = array<i64: 1, 128>}, {pipeline_mode = #tpu.pipeline_mode<synchronous>, transform_indices = @transform_4, window_bounds = array<i64: 1, 128>}, {pipeline_mode = #tpu.pipeline_mode<synchronous>, transform_indices = @transform_5, window_bounds = array<i64: 128, 128>}, {pipeline_mode = #tpu.pipeline_mode<synchronous>, transform_indices = @transform_6, window_bounds = array<i64: 1, 128>}, {pipeline_mode = #tpu.pipeline_mode<synchronous>, transform_indices = @transform_7, window_bounds = array<i64: 1, 128>}, {pipeline_mode = #tpu.pipeline_mode<synchronous>, transform_indices = @transform_8, window_bounds = array<i64: 1, 128>}, {pipeline_mode = #tpu.pipeline_mode<synchronous>, transform_indices = @transform_9, window_bounds = array<i64: 128, 128>}, {pipeline_mode = #tpu.pipeline_mode<synchronous>, transform_indices = @transform_10, window_bounds = array<i64: 1, 128>}, {pipeline_mode = #tpu.pipeline_mode<synchronous>, transform_indices = @transform_11, window_bounds = array<i64: 1, 128>}, {pipeline_mode = #tpu.pipeline_mode<synchronous>, transform_indices = @transform_12, window_bounds = array<i64: 1, 128>}, {transform_indices = @transform_13, window_bounds = array<i64: 16, 128>}]} {
    %c0 = arith.constant 0 : index
    %c0_0 = arith.constant 0 : index
    %0 = vector.load %arg1[%c0, %c0_0] : memref<16x128xbf16, #tpu.memory_space<vmem>>, vector<16x128xbf16>
    %c0_1 = arith.constant 0 : index
    %c0_2 = arith.constant 0 : index
    %1 = vector.load %arg2[%c0_1, %c0_2] : memref<128x128xbf16, #tpu.memory_space<vmem>>, vector<128x128xbf16>
    %cst = arith.constant dense<0.000000e+00> : vector<16x128xf32>
    %2 = tpu.matmul %0, %1, %cst {dimension_numbers = #tpu.dot_dimension_numbers<[1], [0], [0], [1], [0, 0, 1, 1], [], []>} : vector<16x128xbf16>, vector<128x128xbf16>, vector<16x128xf32> -> vector<16x128xf32>
    %c0_3 = arith.constant 0 : index
    %c0_4 = arith.constant 0 : index
    %3 = vector.load %arg3[%c0_3, %c0_4] : memref<1x128xf32, #tpu.memory_space<vmem>>, vector<1x128xf32>
    %4 = vector.broadcast %3 : vector<1x128xf32> to vector<16x128xf32>
    %5 = arith.addf %2, %4 : vector<16x128xf32>
    %cst_5 = arith.constant 0.000000e+00 : f32
    %6 = vector.broadcast %cst_5 : f32 to vector<16x128xf32>
    %7 = arith.maximumf %5, %6 : vector<16x128xf32>
    %cst_6 = arith.constant dense<0.000000e+00> : vector<16xf32>
    %8 = vector.multi_reduction <add>, %7, %cst_6 [1] : vector<16x128xf32> to vector<16xf32>
    %9 = vector.shape_cast %8 : vector<16xf32> to vector<16x1xf32>
    %10 = arith.mulf %7, %7 : vector<16x128xf32>
    %cst_7 = arith.constant dense<0.000000e+00> : vector<16xf32>
    %11 = vector.multi_reduction <add>, %10, %cst_7 [1] : vector<16x128xf32> to vector<16xf32>
    %12 = vector.shape_cast %11 : vector<16xf32> to vector<16x1xf32>
    %cst_8 = arith.constant 1.562500e-02 : f32
    %13 = vector.broadcast %cst_8 : f32 to vector<16x1xf32>
    %14 = arith.mulf %9, %13 : vector<16x1xf32>
    %cst_9 = arith.constant 1.562500e-02 : f32
    %15 = vector.broadcast %cst_9 : f32 to vector<16x1xf32>
    %16 = arith.mulf %12, %15 : vector<16x1xf32>
    %17 = arith.mulf %14, %14 : vector<16x1xf32>
    %18 = arith.subf %16, %17 : vector<16x1xf32>
    %cst_10 = arith.constant 9.99999974E-6 : f32
    %19 = vector.broadcast %cst_10 : f32 to vector<16x1xf32>
    %20 = arith.addf %18, %19 : vector<16x1xf32>
    %21 = math.rsqrt %20 : vector<16x1xf32>
    %22 = vector.broadcast %14 : vector<16x1xf32> to vector<16x128xf32>
    %23 = arith.subf %7, %22 : vector<16x128xf32>
    %24 = vector.broadcast %21 : vector<16x1xf32> to vector<16x128xf32>
    %25 = arith.mulf %23, %24 : vector<16x128xf32>
    %c0_11 = arith.constant 0 : index
    %c0_12 = arith.constant 0 : index
    %26 = vector.load %arg4[%c0_11, %c0_12] : memref<1x128xf32, #tpu.memory_space<vmem>>, vector<1x128xf32>
    %27 = vector.broadcast %26 : vector<1x128xf32> to vector<16x128xf32>
    %28 = arith.mulf %25, %27 : vector<16x128xf32>
    %c0_13 = arith.constant 0 : index
    %c0_14 = arith.constant 0 : index
    %29 = vector.load %arg5[%c0_13, %c0_14] : memref<1x128xf32, #tpu.memory_space<vmem>>, vector<1x128xf32>
    %30 = vector.broadcast %29 : vector<1x128xf32> to vector<16x128xf32>
    %31 = arith.addf %28, %30 : vector<16x128xf32>
    %32 = arith.truncf %31 : vector<16x128xf32> to vector<16x128xbf16>
    %c0_15 = arith.constant 0 : index
    %c0_16 = arith.constant 0 : index
    %33 = vector.load %arg6[%c0_15, %c0_16] : memref<128x128xbf16, #tpu.memory_space<vmem>>, vector<128x128xbf16>
    %cst_17 = arith.constant dense<0.000000e+00> : vector<16x128xf32>
    %34 = tpu.matmul %32, %33, %cst_17 {dimension_numbers = #tpu.dot_dimension_numbers<[1], [0], [0], [1], [0, 0, 1, 1], [], []>} : vector<16x128xbf16>, vector<128x128xbf16>, vector<16x128xf32> -> vector<16x128xf32>
    %c0_18 = arith.constant 0 : index
    %c0_19 = arith.constant 0 : index
    %35 = vector.load %arg7[%c0_18, %c0_19] : memref<1x128xf32, #tpu.memory_space<vmem>>, vector<1x128xf32>
    %36 = vector.broadcast %35 : vector<1x128xf32> to vector<16x128xf32>
    %37 = arith.addf %34, %36 : vector<16x128xf32>
    %cst_20 = arith.constant 0.000000e+00 : f32
    %38 = vector.broadcast %cst_20 : f32 to vector<16x128xf32>
    %39 = arith.maximumf %37, %38 : vector<16x128xf32>
    %cst_21 = arith.constant dense<0.000000e+00> : vector<16xf32>
    %40 = vector.multi_reduction <add>, %39, %cst_21 [1] : vector<16x128xf32> to vector<16xf32>
    %41 = vector.shape_cast %40 : vector<16xf32> to vector<16x1xf32>
    %42 = arith.mulf %39, %39 : vector<16x128xf32>
    %cst_22 = arith.constant dense<0.000000e+00> : vector<16xf32>
    %43 = vector.multi_reduction <add>, %42, %cst_22 [1] : vector<16x128xf32> to vector<16xf32>
    %44 = vector.shape_cast %43 : vector<16xf32> to vector<16x1xf32>
    %cst_23 = arith.constant 0.020833334 : f32
    %45 = vector.broadcast %cst_23 : f32 to vector<16x1xf32>
    %46 = arith.mulf %41, %45 : vector<16x1xf32>
    %cst_24 = arith.constant 0.020833334 : f32
    %47 = vector.broadcast %cst_24 : f32 to vector<16x1xf32>
    %48 = arith.mulf %44, %47 : vector<16x1xf32>
    %49 = arith.mulf %46, %46 : vector<16x1xf32>
    %50 = arith.subf %48, %49 : vector<16x1xf32>
    %cst_25 = arith.constant 9.99999974E-6 : f32
    %51 = vector.broadcast %cst_25 : f32 to vector<16x1xf32>
    %52 = arith.addf %50, %51 : vector<16x1xf32>
    %53 = math.rsqrt %52 : vector<16x1xf32>
    %54 = vector.broadcast %46 : vector<16x1xf32> to vector<16x128xf32>
    %55 = arith.subf %39, %54 : vector<16x128xf32>
    %56 = vector.broadcast %53 : vector<16x1xf32> to vector<16x128xf32>
    %57 = arith.mulf %55, %56 : vector<16x128xf32>
    %c0_26 = arith.constant 0 : index
    %c0_27 = arith.constant 0 : index
    %58 = vector.load %arg8[%c0_26, %c0_27] : memref<1x128xf32, #tpu.memory_space<vmem>>, vector<1x128xf32>
    %59 = vector.broadcast %58 : vector<1x128xf32> to vector<16x128xf32>
    %60 = arith.mulf %57, %59 : vector<16x128xf32>
    %c0_28 = arith.constant 0 : index
    %c0_29 = arith.constant 0 : index
    %61 = vector.load %arg9[%c0_28, %c0_29] : memref<1x128xf32, #tpu.memory_space<vmem>>, vector<1x128xf32>
    %62 = vector.broadcast %61 : vector<1x128xf32> to vector<16x128xf32>
    %63 = arith.addf %60, %62 : vector<16x128xf32>
    %64 = arith.truncf %63 : vector<16x128xf32> to vector<16x128xbf16>
    %c0_30 = arith.constant 0 : index
    %c0_31 = arith.constant 0 : index
    %65 = vector.load %arg10[%c0_30, %c0_31] : memref<128x128xbf16, #tpu.memory_space<vmem>>, vector<128x128xbf16>
    %cst_32 = arith.constant dense<0.000000e+00> : vector<16x128xf32>
    %66 = tpu.matmul %64, %65, %cst_32 {dimension_numbers = #tpu.dot_dimension_numbers<[1], [0], [0], [1], [0, 0, 1, 1], [], []>} : vector<16x128xbf16>, vector<128x128xbf16>, vector<16x128xf32> -> vector<16x128xf32>
    %c0_33 = arith.constant 0 : index
    %c0_34 = arith.constant 0 : index
    %67 = vector.load %arg11[%c0_33, %c0_34] : memref<1x128xf32, #tpu.memory_space<vmem>>, vector<1x128xf32>
    %68 = vector.broadcast %67 : vector<1x128xf32> to vector<16x128xf32>
    %69 = arith.addf %66, %68 : vector<16x128xf32>
    %c0_35 = arith.constant 0 : index
    %c0_36 = arith.constant 0 : index
    %70 = vector.load %arg14[%c0_35, %c0_36] : memref<16x128xf32, #tpu.memory_space<vmem>>, vector<16x128xf32>
    tpu.vector_store %arg14[%c0_35, %c0_36], %69 {strides = array<i32>} : memref<16x128xf32, #tpu.memory_space<vmem>>, vector<16x128xf32>,
    return
  }
  func.func @transform_0(%arg0: i32) -> (i32, i32) {
    %c0_i32 = arith.constant 0 : i32
    %c0_i32_0 = arith.constant 0 : i32
    return %arg0, %c0_i32 : i32, i32
  }
  func.func @transform_1(%arg0: i32) -> (i32, i32) {
    %c0_i32 = arith.constant 0 : i32
    %c0_i32_0 = arith.constant 0 : i32
    %c0_i32_1 = arith.constant 0 : i32
    return %c0_i32, %c0_i32_0 : i32, i32
  }
  func.func @transform_2(%arg0: i32) -> (i32, i32) {
    %c0_i32 = arith.constant 0 : i32
    %c0_i32_0 = arith.constant 0 : i32
    %c0_i32_1 = arith.constant 0 : i32
    return %c0_i32, %c0_i32_0 : i32, i32
  }
  func.func @transform_3(%arg0: i32) -> (i32, i32) {
    %c0_i32 = arith.constant 0 : i32
    %c0_i32_0 = arith.constant 0 : i32
    %c0_i32_1 = arith.constant 0 : i32
    return %c0_i32, %c0_i32_0 : i32, i32
  }
  func.func @transform_4(%arg0: i32) -> (i32, i32) {
    %c0_i32 = arith.constant 0 : i32
    %c0_i32_0 = arith.constant 0 : i32
    %c0_i32_1 = arith.constant 0 : i32
    return %c0_i32, %c0_i32_0 : i32, i32
  }
  func.func @transform_5(%arg0: i32) -> (i32, i32) {
    %c0_i32 = arith.constant 0 : i32
    %c0_i32_0 = arith.constant 0 : i32
    %c0_i32_1 = arith.constant 0 : i32
    return %c0_i32, %c0_i32_0 : i32, i32
  }
  func.func @transform_6(%arg0: i32) -> (i32, i32) {
    %c0_i32 = arith.constant 0 : i32
    %c0_i32_0 = arith.constant 0 : i32
    %c0_i32_1 = arith.constant 0 : i32
    return %c0_i32, %c0_i32_0 : i32, i32
  }
  func.func @transform_7(%arg0: i32) -> (i32, i32) {
    %c0_i32 = arith.constant 0 : i32
    %c0_i32_0 = arith.constant 0 : i32
    %c0_i32_1 = arith.constant 0 : i32
    return %c0_i32, %c0_i32_0 : i32, i32
  }
  func.func @transform_8(%arg0: i32) -> (i32, i32) {
    %c0_i32 = arith.constant 0 : i32
    %c0_i32_0 = arith.constant 0 : i32
    %c0_i32_1 = arith.constant 0 : i32
    return %c0_i32, %c0_i32_0 : i32, i32
  }
  func.func @transform_9(%arg0: i32) -> (i32, i32) {
    %c0_i32 = arith.constant 0 : i32
    %c0_i32_0 = arith.constant 0 : i32
    %c0_i32_1 = arith.constant 0 : i32
    return %c0_i32, %c0_i32_0 : i32, i32
  }
  func.func @transform_10(%arg0: i32) -> (i32, i32) {
    %c0_i32 = arith.constant 0 : i32
    %c0_i32_0 = arith.constant 0 : i32
    %c0_i32_1 = arith.constant 0 : i32
    return %c0_i32, %c0_i32_0 : i32, i32
  }
  func.func @transform_11(%arg0: i32) -> (i32, i32) {
    %c0_i32 = arith.constant 0 : i32
    %c0_i32_0 = arith.constant 0 : i32
    %c0_i32_1 = arith.constant 0 : i32
    return %c0_i32, %c0_i32_0 : i32, i32
  }
  func.func @transform_12(%arg0: i32) -> (i32, i32) {
    %c0_i32 = arith.constant 0 : i32
    %c0_i32_0 = arith.constant 0 : i32
    %c0_i32_1 = arith.constant 0 : i32
    return %c0_i32, %c0_i32_0 : i32, i32
  }
  func.func @transform_13(%arg0: i32) -> (i32, i32) {
    %c0_i32 = arith.constant 0 : i32
    %c0_i32_0 = arith.constant 0 : i32
    return %arg0, %c0_i32 : i32, i32
  }
}

</mosaic_0001>

<llo_original>
// kernel: _mlp_forward.1
$region0: #{_mlp_forward.1}
  #allocation0 [shape = 'u32[]', space=smem, size = 0x4, offset = 0x4, fixed_abs, tag = 'smem constant byte address 0x4 - core index']
  #allocation1 [shape = 'u32[144,128]{1,0:T(1,128)}', space=vmem, size = 0x12000, scoped, tag = 'internal scratch']
  %s0 = inlined_call_operand.vmem [shape: bf16[16,128], index: 0, kind: input, shape index: {}]
  %s1 = inlined_call_operand.hbm [shape: bf16[128,128], index: 1, kind: input, shape index: {}]
  %s2 = inlined_call_operand.vmem [shape: f32[1,128], index: 2, kind: input, shape index: {}]
  %s3 = inlined_call_operand.vmem [shape: f32[1,128], index: 3, kind: input, shape index: {}]
  %s4 = inlined_call_operand.vmem [shape: f32[1,128], index: 4, kind: input, shape index: {}]
  %s5 = inlined_call_operand.hbm [shape: bf16[128,128], index: 5, kind: input, shape index: {}]
  %s6 = inlined_call_operand.vmem [shape: f32[1,128], index: 6, kind: input, shape index: {}]
  %s7 = inlined_call_operand.vmem [shape: f32[1,128], index: 7, kind: input, shape index: {}]
  %s8 = inlined_call_operand.vmem [shape: f32[1,128], index: 8, kind: input, shape index: {}]
  %s9 = inlined_call_operand.hbm [shape: bf16[128,128], index: 9, kind: input, shape index: {}]
  %s10 = inlined_call_operand.vmem [shape: f32[1,128], index: 10, kind: input, shape index: {}]
  %s11 = inlined_call_operand.vmem [shape: f32[1,128], index: 11, kind: input, shape index: {}]
  %s12 = inlined_call_operand.vmem [shape: f32[1,128], index: 12, kind: input, shape index: {}]
  %s13 = inlined_call_operand.vmem [shape: f32[16,128], index: 13, kind: output, shape index: {}]
  %s14 = sld [smem:[#allocation0]]
  $region74: #{_mlp_forward.1} parent=0
    _
  %s16 = ssub.s32 1, %s14
  %s17 = scalar_select 0, %s16, %s14
  $region1: #{_mlp_forward.1} parent=0
    #allocation2 [shape = 'u8[32768]{0}', space=vmem, size = 0x8000, scoped, tag = 'input window, operand 1, single buffered']
    #allocation3 [shape = 's32[1]{0}', space=sflag, size = 0x4, scoped, tag = 'scoped memory for _mlp_forward.1']
    #allocation4 [shape = 'u8[32768]{0}', space=vmem, size = 0x8000, scoped, tag = 'input window, operand 5, single buffered']
    #allocation5 [shape = 's32[1]{0}', space=sflag, size = 0x4, scoped, tag = 'scoped memory for _mlp_forward.1']
    #allocation6 [shape = 'u8[32768]{0}', space=vmem, size = 0x8000, scoped, tag = 'input window, operand 9, single buffered']
    %18 = vsyncpa [#allocation3], 0
    %19 = vsyncpa [#allocation5], 0
    // Predicated region
    $region2: #{_mlp_forward.1} parent=1 // pred_check
      _
    $region3: #{_mlp_forward.1} parent=1 // pred_check_branch
      %21 = sbr.rel (0) target = $region5
    $region4: #{_mlp_forward.1} parent=1 // pred_region
      _
    $region5: #{_mlp_forward.1} parent=1 // pred_fallthru
      _
    // Predicated region
    $region6: #{_mlp_forward.1} parent=1 // pred_check
      _
    $region7: #{_mlp_forward.1} parent=1 // pred_check_branch
      %23 = sbr.rel (0) target = $region9
    $region8: #{_mlp_forward.1} parent=1 // pred_region
      %s25 = ssub.s32 1024, 1024
      %26 = vsyncadd [#allocation3], %s25
      %s27 = sshll.u32 [#allocation2], 4
      %s28 = int_to_ptr.vmem [resolvable:$true] %s27
      %33 = dma.hbm_to_vmem [thread:$0]  %s1, 1024, %s28, [#allocation3], 64, 64, 4
    $region9: #{_mlp_forward.1} parent=1 // pred_fallthru
      _
    // Predicated region
    $region10: #{_mlp_forward.1} parent=1 // pred_check
      _
    $region11: #{_mlp_forward.1} parent=1 // pred_check_branch
      %35 = sbr.rel (0) target = $region13
    $region12: #{_mlp_forward.1} parent=1 // pred_region
      _
    $region13: #{_mlp_forward.1} parent=1 // pred_fallthru
      _
    // Predicated region
    $region14: #{_mlp_forward.1} parent=1 // pred_check
      _
    $region15: #{_mlp_forward.1} parent=1 // pred_check_branch
      %37 = sbr.rel (0) target = $region17
    $region16: #{_mlp_forward.1} parent=1 // pred_region
      _
    $region17: #{_mlp_forward.1} parent=1 // pred_fallthru
      _
    // Predicated region
    $region18: #{_mlp_forward.1} parent=1 // pred_check
      _
    $region19: #{_mlp_forward.1} parent=1 // pred_check_branch
      %39 = sbr.rel (0) target = $region21
    $region20: #{_mlp_forward.1} parent=1 // pred_region
      _
    $region21: #{_mlp_forward.1} parent=1 // pred_fallthru
      _
    // Predicated region
    $region22: #{_mlp_forward.1} parent=1 // pred_check
      _
    $region23: #{_mlp_forward.1} parent=1 // pred_check_branch
      %41 = sbr.rel (0) target = $region25
    $region24: #{_mlp_forward.1} parent=1 // pred_region
      %s43 = ssub.s32 1024, 1024
      %44 = vsyncadd [#allocation5], %s43
      %s45 = sshll.u32 [#allocation4], 4
      %s46 = int_to_ptr.vmem [resolvable:$true] %s45
      %51 = dma.hbm_to_vmem [thread:$0]  %s5, 1024, %s46, [#allocation5], 64, 64, 4
    $region25: #{_mlp_forward.1} parent=1 // pred_fallthru
      _
    // Predicated region
    $region26: #{_mlp_forward.1} parent=1 // pred_check
      _
    $region27: #{_mlp_forward.1} parent=1 // pred_check_branch
      %53 = sbr.rel (0) target = $region29
    $region28: #{_mlp_forward.1} parent=1 // pred_region
      _
    $region29: #{_mlp_forward.1} parent=1 // pred_fallthru
      _
    // Predicated region
    $region30: #{_mlp_forward.1} parent=1 // pred_check
      _
    $region31: #{_mlp_forward.1} parent=1 // pred_check_branch
      %55 = sbr.rel (0) target = $region33
    $region32: #{_mlp_forward.1} parent=1 // pred_region
      _
    $region33: #{_mlp_forward.1} parent=1 // pred_fallthru
      _
    // Predicated region
    $region34: #{_mlp_forward.1} parent=1 // pred_check
      _
    $region35: #{_mlp_forward.1} parent=1 // pred_check_branch
      %57 = sbr.rel (0) target = $region37
    $region36: #{_mlp_forward.1} parent=1 // pred_region
      _
    $region37: #{_mlp_forward.1} parent=1 // pred_fallthru
      _
    // Predicated region
    $region38: #{_mlp_forward.1} parent=1 // pred_check
      _
    $region39: #{_mlp_forward.1} parent=1 // pred_check_branch
      %59 = sbr.rel (0) target = $region41
    $region40: #{_mlp_forward.1} parent=1 // pred_region
      %s61 = ssub.s32 1024, 1024
      %62 = vsyncadd [#allocation5], %s61
      %s63 = sshll.u32 [#allocation6], 4
      %s64 = int_to_ptr.vmem [resolvable:$true] %s63
      %69 = dma.hbm_to_vmem [thread:$0]  %s9, 1024, %s64, [#allocation5], 64, 64, 4
    $region41: #{_mlp_forward.1} parent=1 // pred_fallthru
      _
    // Predicated region
    $region42: #{_mlp_forward.1} parent=1 // pred_check
      _
    $region43: #{_mlp_forward.1} parent=1 // pred_check_branch
      %71 = sbr.rel (0) target = $region45
    $region44: #{_mlp_forward.1} parent=1 // pred_region
      _
    $region45: #{_mlp_forward.1} parent=1 // pred_fallthru
      _
    // Predicated region
    $region46: #{_mlp_forward.1} parent=1 // pred_check
      _
    $region47: #{_mlp_forward.1} parent=1 // pred_check_branch
      %73 = sbr.rel (0) target = $region49
    $region48: #{_mlp_forward.1} parent=1 // pred_region
      _
    $region49: #{_mlp_forward.1} parent=1 // pred_fallthru
      _
    // Predicated region
    $region50: #{_mlp_forward.1} parent=1 // pred_check
      _
    $region51: #{_mlp_forward.1} parent=1 // pred_check_branch
      %75 = sbr.rel (0) target = $region53
    $region52: #{_mlp_forward.1} parent=1 // pred_region
      _
    $region53: #{_mlp_forward.1} parent=1 // pred_fallthru
      _
    // Predicated region
    $region54: #{_mlp_forward.1} parent=1 // pred_check
      _
    $region55: #{_mlp_forward.1} parent=1 // pred_check_branch
      %77 = sbr.rel (0) target = $region57
    $region56: #{_mlp_forward.1} parent=1 // pred_region
      %78 = dma.done [#allocation3], 1024
    $region57: #{_mlp_forward.1} parent=1 // pred_fallthru
      _
    // Predicated region
    $region58: #{_mlp_forward.1} parent=1 // pred_check
      _
    $region59: #{_mlp_forward.1} parent=1 // pred_check_branch
      %80 = sbr.rel (0) target = $region61
    $region60: #{_mlp_forward.1} parent=1 // pred_region
      %81 = dma.done [#allocation5], 1024
    $region61: #{_mlp_forward.1} parent=1 // pred_fallthru
      _
    // Predicated region
    $region62: #{_mlp_forward.1} parent=1 // pred_check
      _
    $region63: #{_mlp_forward.1} parent=1 // pred_check_branch
      %83 = sbr.rel (0) target = $region65
    $region64: #{_mlp_forward.1} parent=1 // pred_region
      %84 = dma.done [#allocation5], 1024
    $region65: #{_mlp_forward.1} parent=1 // pred_fallthru
      _
    %v86 = vld [vmem:[%s0] sm:$0xf]
    %v87 = vld [vmem:[%s0 + $0x4] sm:$0xf]
    %v88 = vld [vmem:[#allocation2] sm:$0xf]
    %v89 = vld [vmem:[#allocation2 + $0x4] sm:$0xf]
    %v90 = vld [vmem:[#allocation2 + $0x8] sm:$0xf]
    %v91 = vld [vmem:[#allocation2 + $0xc] sm:$0xf]
    %v92 = vld [vmem:[#allocation2 + $0x10] sm:$0xf]
    %v93 = vld [vmem:[#allocation2 + $0x14] sm:$0xf]
    %v94 = vld [vmem:[#allocation2 + $0x18] sm:$0xf]
    %v95 = vld [vmem:[#allocation2 + $0x1c] sm:$0xf]
    %v96 = vld [vmem:[#allocation2 + $0x20] sm:$0xf]
    %v97 = vld [vmem:[#allocation2 + $0x24] sm:$0xf]
    %v98 = vld [vmem:[#allocation2 + $0x28] sm:$0xf]
    %v99 = vld [vmem:[#allocation2 + $0x2c] sm:$0xf]
    %v100 = vld [vmem:[#allocation2 + $0x30] sm:$0xf]
    %v101 = vld [vmem:[#allocation2 + $0x34] sm:$0xf]
    %v102 = vld [vmem:[#allocation2 + $0x38] sm:$0xf]
    %v103 = vld [vmem:[#allocation2 + $0x3c] sm:$0xf]
    %v104 = vld [vmem:[%s2] sm:$0x1]
    %v106 = vlaneseq
    %v107 = vshrl.u32 %v106, 7
    %v108 = vsub.s32 0, %v107
    %v109 = vrot.slane %v104, %v108
    %v113 = vunpack.c.l.b16 %v86
    %v114 = vunpack.c.l.b16 %v87
    %v115 = vpack.c.b16 %v114, %v113
    %v133 = vunpack.c.l.b16 %v88
    %v134 = vunpack.c.l.b16 %v89
    %v135 = vunpack.c.l.b16 %v90
    %v136 = vunpack.c.l.b16 %v91
    %v137 = vunpack.c.l.b16 %v92
    %v138 = vunpack.c.l.b16 %v93
    %v139 = vunpack.c.l.b16 %v94
    %v140 = vunpack.c.l.b16 %v95
    %v141 = vunpack.c.l.b16 %v96
    %v142 = vunpack.c.l.b16 %v97
    %v143 = vunpack.c.l.b16 %v98
    %v144 = vunpack.c.l.b16 %v99
    %v145 = vunpack.c.l.b16 %v100
    %v146 = vunpack.c.l.b16 %v101
    %v147 = vunpack.c.l.b16 %v102
    %v148 = vunpack.c.l.b16 %v103
    %v149 = vpack.c.b16 %v134, %v133
    %v150 = vpack.c.b16 %v136, %v135
    %v151 = vpack.c.b16 %v138, %v137
    %v152 = vpack.c.b16 %v140, %v139
    %v153 = vpack.c.b16 %v142, %v141
    %v154 = vpack.c.b16 %v144, %v143
    %v155 = vpack.c.b16 %v146, %v145
    %v156 = vpack.c.b16 %v148, %v147
    %165 = vmatprep.subr.bf16.mxu0 0
    %166 = vmatpush1.bf16.msra.mxu0 %v149
    %167 = vmatprep.subr.bf16.mxu0 0
    %168 = vmatpush1.bf16.msra.mxu0 %v150
    %169 = vmatprep.subr.bf16.mxu0 0
    %170 = vmatpush1.bf16.msra.mxu0 %v151
    %171 = vmatprep.subr.bf16.mxu0 0
    %172 = vmatpush1.bf16.msra.mxu0 %v152
    %173 = vmatprep.subr.bf16.mxu0 0
    %174 = vmatpush1.bf16.msra.mxu0 %v153
    %175 = vmatprep.subr.bf16.mxu0 0
    %176 = vmatpush1.bf16.msra.mxu0 %v154
    %177 = vmatprep.subr.bf16.mxu0 0
    %178 = vmatpush1.bf16.msra.mxu0 %v155
    %179 = vmatprep.subr.bf16.mxu0 0
    %180 = vmatpush1.bf16.msra.mxu0 %v156
    %181 = vmatprep.subr.bf16.mxu0 0
    %182 = vmatpush1.bf16.msra.mxu0 0
    %183 = vmatprep.subr.bf16.mxu0 0
    %184 = vmatpush1.bf16.msra.mxu0 0
    %185 = vmatprep.subr.bf16.mxu0 0
    %186 = vmatpush1.bf16.msra.mxu0 0
    %187 = vmatprep.subr.bf16.mxu0 0
    %188 = vmatpush1.bf16.msra.mxu0 0
    %189 = vmatprep.subr.bf16.mxu0 0
    %190 = vmatpush1.bf16.msra.mxu0 0
    %191 = vmatprep.subr.bf16.mxu0 0
    %192 = vmatpush1.bf16.msra.mxu0 0
    %193 = vmatprep.subr.bf16.mxu0 0
    %194 = vmatpush1.bf16.msra.mxu0 0
    %195 = vmatprep.subr.bf16.mxu0 0
    %196 = vmatpush1.bf16.msra.mxu0 0
    %197 = vmatprep.mubr.bf16.mxu0 0
    %198 = vmatmul.mubr.bf16.gmra.mrb[0].mxu0 %v115
    %v199 = vpop.f32.mrb[0].mxu0
    %v200 = vadd.f32 %v109, %v199
    %v201 = vpop.f32.mrb[0].mxu0
    %v202 = vpop.f32.mrb[0].mxu0
    %v203 = vadd.f32 %v109, %v202
    %v204 = vpop.f32.mrb[0].mxu0
    %205 = vdwg.mxu0
    %v206 = vmax.f32 %v200, 0.0
    %v207 = vmax.f32 %v203, 0.0
    %208 = vadd.xlane.f32.xlu0 %v206
    %v209 = vpop.xlane.xlu0 %208
    %210 = vadd.xlane.f32.xlu0 %v207
    %v211 = vpop.xlane.xlu0 %210
    %v212 = vmul.f32 %v206, %v206
    %v213 = vmul.f32 %v207, %v207
    %214 = vadd.xlane.f32.xlu0 %v212
    %v215 = vpop.xlane.xlu0 %214
    %216 = vadd.xlane.f32.xlu0 %v213
    %v217 = vpop.xlane.xlu0 %216
    %v218 = vmul.f32 %v209, 0.015625
    %v219 = vmul.f32 %v211, 0.015625
    %v220 = vmul.f32 %v215, 0.015625
    %v221 = vmul.f32 %v217, 0.015625
    %v222 = vmul.f32 %v218, %v218
    %v223 = vmul.f32 %v219, %v219
    %v224 = vsub.f32 %v220, %v222
    %v225 = vsub.f32 %v221, %v223
    %v226 = vadd.f32 %v224, 1e-05
    %v227 = vadd.f32 %v225, 1e-05
    %v228 = vrsqrt.pop %v226
    %v229 = vrsqrt.pop %v227
    %v230 = vsub.f32 %v206, %v218
    %v231 = vsub.f32 %v207, %v219
    %v232 = vmul.f32 %v230, %v228
    %v233 = vmul.f32 %v231, %v229
    %v234 = vld [vmem:[%s3] sm:$0x1]
    %v236 = vlaneseq
    %v237 = vshrl.u32 %v236, 7
    %v238 = vsub.s32 0, %v237
    %v239 = vrot.slane %v234, %v238
    %v241 = vmul.f32 %v232, %v239
    %v242 = vmul.f32 %v233, %v239
    %v243 = vld [vmem:[%s4] sm:$0x1]
    %v245 = vlaneseq
    %v246 = vshrl.u32 %v245, 7
    %v247 = vsub.s32 0, %v246
    %v248 = vrot.slane %v243, %v247
    %v250 = vadd.f32 %v241, %v248
    %v251 = vadd.f32 %v242, %v248
    %v252 = vpack.c.bf16 %v251, %v250
    %v253 = vld [vmem:[#allocation4] sm:$0xf]
    %v254 = vld [vmem:[#allocation4 + $0x4] sm:$0xf]
    %v255 = vld [vmem:[#allocation4 + $0x8] sm:$0xf]
    %v256 = vld [vmem:[#allocation4 + $0xc] sm:$0xf]
    %v257 = vld [vmem:[#allocation4 + $0x10] sm:$0xf]
    %v258 = vld [vmem:[#allocation4 + $0x14] sm:$0xf]
    %v259 = vld [vmem:[#allocation4 + $0x18] sm:$0xf]
    %v260 = vld [vmem:[#allocation4 + $0x1c] sm:$0xf]
    %v261 = vld [vmem:[#allocation4 + $0x20] sm:$0xf]
    %v262 = vld [vmem:[#allocation4 + $0x24] sm:$0xf]
    %v263 = vld [vmem:[#allocation4 + $0x28] sm:$0xf]
    %v264 = vld [vmem:[#allocation4 + $0x2c] sm:$0xf]
    %v265 = vld [vmem:[#allocation4 + $0x30] sm:$0xf]
    %v266 = vld [vmem:[#allocation4 + $0x34] sm:$0xf]
    %v267 = vld [vmem:[#allocation4 + $0x38] sm:$0xf]
    %v268 = vld [vmem:[#allocation4 + $0x3c] sm:$0xf]
    %v269 = vld [vmem:[%s6] sm:$0x1]
    %v271 = vlaneseq
    %v272 = vshrl.u32 %v271, 7
    %v273 = vsub.s32 0, %v272
    %v274 = vrot.slane %v269, %v273
    %v292 = vunpack.c.l.b16 %v253
    %v293 = vunpack.c.l.b16 %v254
    %v294 = vunpack.c.l.b16 %v255
    %v295 = vunpack.c.l.b16 %v256
    %v296 = vunpack.c.l.b16 %v257
    %v297 = vunpack.c.l.b16 %v258
    %v298 = vunpack.c.l.b16 %v259
    %v299 = vunpack.c.l.b16 %v260
    %v300 = vunpack.c.l.b16 %v261
    %v301 = vunpack.c.l.b16 %v262
    %v302 = vunpack.c.l.b16 %v263
    %v303 = vunpack.c.l.b16 %v264
    %v304 = vunpack.c.l.b16 %v265
    %v305 = vunpack.c.l.b16 %v266
    %v306 = vunpack.c.l.b16 %v267
    %v307 = vunpack.c.l.b16 %v268
    %v308 = vpack.c.b16 %v293, %v292
    %v309 = vpack.c.b16 %v295, %v294
    %v310 = vpack.c.b16 %v297, %v296
    %v311 = vpack.c.b16 %v299, %v298
    %v312 = vpack.c.b16 %v301, %v300
    %v313 = vpack.c.b16 %v303, %v302
    %v314 = vpack.c.b16 %v305, %v304
    %v315 = vpack.c.b16 %v307, %v306
    %324 = vmatprep.subr.bf16.mxu0 0
    %325 = vmatpush1.bf16.msra.mxu0 %v308
    %326 = vmatprep.subr.bf16.mxu0 0
    %327 = vmatpush1.bf16.msra.mxu0 %v309
    %328 = vmatprep.subr.bf16.mxu0 0
    %329 = vmatpush1.bf16.msra.mxu0 %v310
    %330 = vmatprep.subr.bf16.mxu0 0
    %331 = vmatpush1.bf16.msra.mxu0 %v311
    %332 = vmatprep.subr.bf16.mxu0 0
    %333 = vmatpush1.bf16.msra.mxu0 %v312
    %334 = vmatprep.subr.bf16.mxu0 0
    %335 = vmatpush1.bf16.msra.mxu0 %v313
    %336 = vmatprep.subr.bf16.mxu0 0
    %337 = vmatpush1.bf16.msra.mxu0 %v314
    %338 = vmatprep.subr.bf16.mxu0 0
    %339 = vmatpush1.bf16.msra.mxu0 %v315
    %340 = vmatprep.subr.bf16.mxu0 0
    %341 = vmatpush1.bf16.msra.mxu0 0
    %342 = vmatprep.subr.bf16.mxu0 0
    %343 = vmatpush1.bf16.msra.mxu0 0
    %344 = vmatprep.subr.bf16.mxu0 0
    %345 = vmatpush1.bf16.msra.mxu0 0
    %346 = vmatprep.subr.bf16.mxu0 0
    %347 = vmatpush1.bf16.msra.mxu0 0
    %348 = vmatprep.subr.bf16.mxu0 0
    %349 = vmatpush1.bf16.msra.mxu0 0
    %350 = vmatprep.subr.bf16.mxu0 0
    %351 = vmatpush1.bf16.msra.mxu0 0
    %352 = vmatprep.subr.bf16.mxu0 0
    %353 = vmatpush1.bf16.msra.mxu0 0
    %354 = vmatprep.subr.bf16.mxu0 0
    %355 = vmatpush1.bf16.msra.mxu0 0
    %356 = vmatprep.mubr.bf16.mxu0 0
    %357 = vmatmul.mubr.bf16.gmra.mrb[0].mxu0 %v252
    %v358 = vpop.f32.mrb[0].mxu0
    %v359 = vadd.f32 %v274, %v358
    %v360 = vpop.f32.mrb[0].mxu0
    %v361 = vpop.f32.mrb[0].mxu0
    %v362 = vadd.f32 %v274, %v361
    %v363 = vpop.f32.mrb[0].mxu0
    %364 = vdwg.mxu0
    %v365 = vmax.f32 %v359, 0.0
    %v366 = vmax.f32 %v362, 0.0
    %367 = vadd.xlane.f32.xlu0 %v365
    %v368 = vpop.xlane.xlu0 %367
    %369 = vadd.xlane.f32.xlu0 %v366
    %v370 = vpop.xlane.xlu0 %369
    %v371 = vmul.f32 %v365, %v365
    %v372 = vmul.f32 %v366, %v366
    %373 = vadd.xlane.f32.xlu0 %v371
    %v374 = vpop.xlane.xlu0 %373
    %375 = vadd.xlane.f32.xlu0 %v372
    %v376 = vpop.xlane.xlu0 %375
    %v377 = vmul.f32 %v368, 0.020833334
    %v378 = vmul.f32 %v370, 0.020833334
    %v379 = vmul.f32 %v374, 0.020833334
    %v380 = vmul.f32 %v376, 0.020833334
    %v381 = vmul.f32 %v377, %v377
    %v382 = vmul.f32 %v378, %v378
    %v383 = vsub.f32 %v379, %v381
    %v384 = vsub.f32 %v380, %v382
    %v385 = vadd.f32 %v383, 1e-05
    %v386 = vadd.f32 %v384, 1e-05
    %v387 = vrsqrt.pop %v385
    %v388 = vrsqrt.pop %v386
    %v389 = vsub.f32 %v365, %v377
    %v390 = vsub.f32 %v366, %v378
    %v391 = vmul.f32 %v389, %v387
    %v392 = vmul.f32 %v390, %v388
    %v393 = vld [vmem:[%s7] sm:$0x1]
    %v395 = vlaneseq
    %v396 = vshrl.u32 %v395, 7
    %v397 = vsub.s32 0, %v396
    %v398 = vrot.slane %v393, %v397
    %v400 = vmul.f32 %v391, %v398
    %v401 = vmul.f32 %v392, %v398
    %v402 = vld [vmem:[%s8] sm:$0x1]
    %v404 = vlaneseq
    %v405 = vshrl.u32 %v404, 7
    %v406 = vsub.s32 0, %v405
    %v407 = vrot.slane %v402, %v406
    %v409 = vadd.f32 %v400, %v407
    %v410 = vadd.f32 %v401, %v407
    %v411 = vpack.c.bf16 %v410, %v409
    %v412 = vld [vmem:[#allocation6] sm:$0xf]
    %v413 = vld [vmem:[#allocation6 + $0x4] sm:$0xf]
    %v414 = vld [vmem:[#allocation6 + $0x8] sm:$0xf]
    %v415 = vld [vmem:[#allocation6 + $0xc] sm:$0xf]
    %v416 = vld [vmem:[#allocation6 + $0x10] sm:$0xf]
    %v417 = vld [vmem:[#allocation6 + $0x14] sm:$0xf]
    %v418 = vld [vmem:[#allocation6 + $0x18] sm:$0xf]
    %v419 = vld [vmem:[#allocation6 + $0x1c] sm:$0xf]
    %v420 = vld [vmem:[#allocation6 + $0x20] sm:$0xf]
    %v421 = vld [vmem:[#allocation6 + $0x24] sm:$0xf]
    %v422 = vld [vmem:[#allocation6 + $0x28] sm:$0xf]
    %v423 = vld [vmem:[#allocation6 + $0x2c] sm:$0xf]
    %v424 = vld [vmem:[#allocation6 + $0x30] sm:$0xf]
    %v425 = vld [vmem:[#allocation6 + $0x34] sm:$0xf]
    %v426 = vld [vmem:[#allocation6 + $0x38] sm:$0xf]
    %v427 = vld [vmem:[#allocation6 + $0x3c] sm:$0xf]
    %v428 = vld [vmem:[%s10] sm:$0x1]
    %v430 = vlaneseq
    %v431 = vshrl.u32 %v430, 7
    %v432 = vsub.s32 0, %v431
    %v433 = vrot.slane %v428, %v432
    %v451 = vunpack.c.l.b16 %v412
    %v452 = vunpack.c.l.b16 %v413
    %v453 = vunpack.c.l.b16 %v414
    %v454 = vunpack.c.l.b16 %v415
    %v455 = vunpack.c.l.b16 %v416
    %v456 = vunpack.c.l.b16 %v417
    %v457 = vunpack.c.l.b16 %v418
    %v458 = vunpack.c.l.b16 %v419
    %v459 = vunpack.c.l.b16 %v420
    %v460 = vunpack.c.l.b16 %v421
    %v461 = vunpack.c.l.b16 %v422
    %v462 = vunpack.c.l.b16 %v423
    %v463 = vunpack.c.l.b16 %v424
    %v464 = vunpack.c.l.b16 %v425
    %v465 = vunpack.c.l.b16 %v426
    %v466 = vunpack.c.l.b16 %v427
    %v467 = vpack.c.b16 %v452, %v451
    %v468 = vpack.c.b16 %v454, %v453
    %v469 = vpack.c.b16 %v456, %v455
    %v470 = vpack.c.b16 %v458, %v457
    %v471 = vpack.c.b16 %v460, %v459
    %v472 = vpack.c.b16 %v462, %v461
    %v473 = vpack.c.b16 %v464, %v463
    %v474 = vpack.c.b16 %v466, %v465
    %483 = vmatprep.subr.bf16.mxu0 0
    %484 = vmatpush1.bf16.msra.mxu0 %v467
    %485 = vmatprep.subr.bf16.mxu0 0
    %486 = vmatpush1.bf16.msra.mxu0 %v468
    %487 = vmatprep.subr.bf16.mxu0 0
    %488 = vmatpush1.bf16.msra.mxu0 %v469
    %489 = vmatprep.subr.bf16.mxu0 0
    %490 = vmatpush1.bf16.msra.mxu0 %v470
    %491 = vmatprep.subr.bf16.mxu0 0
    %492 = vmatpush1.bf16.msra.mxu0 %v471
    %493 = vmatprep.subr.bf16.mxu0 0
    %494 = vmatpush1.bf16.msra.mxu0 %v472
    %495 = vmatprep.subr.bf16.mxu0 0
    %496 = vmatpush1.bf16.msra.mxu0 %v473
    %497 = vmatprep.subr.bf16.mxu0 0
    %498 = vmatpush1.bf16.msra.mxu0 %v474
    %499 = vmatprep.subr.bf16.mxu0 0
    %500 = vmatpush1.bf16.msra.mxu0 0
    %501 = vmatprep.subr.bf16.mxu0 0
    %502 = vmatpush1.bf16.msra.mxu0 0
    %503 = vmatprep.subr.bf16.mxu0 0
    %504 = vmatpush1.bf16.msra.mxu0 0
    %505 = vmatprep.subr.bf16.mxu0 0
    %506 = vmatpush1.bf16.msra.mxu0 0
    %507 = vmatprep.subr.bf16.mxu0 0
    %508 = vmatpush1.bf16.msra.mxu0 0
    %509 = vmatprep.subr.bf16.mxu0 0
    %510 = vmatpush1.bf16.msra.mxu0 0
    %511 = vmatprep.subr.bf16.mxu0 0
    %512 = vmatpush1.bf16.msra.mxu0 0
    %513 = vmatprep.subr.bf16.mxu0 0
    %514 = vmatpush1.bf16.msra.mxu0 0
    %515 = vmatprep.mubr.bf16.mxu0 0
    %516 = vmatmul.mubr.bf16.gmra.mrb[0].mxu0 %v411
    %v517 = vpop.f32.mrb[0].mxu0
    %v518 = vadd.f32 %v433, %v517
    %v519 = vpop.f32.mrb[0].mxu0
    %v520 = vpop.f32.mrb[0].mxu0
    %v521 = vadd.f32 %v433, %v520
    %v522 = vpop.f32.mrb[0].mxu0
    %523 = vdwg.mxu0
    %524 = vst [vmem:[%s13] sm:$0xff] %v518
    %525 = vst [vmem:[%s13 + $0x8] sm:$0xff] %v521
    // Predicated region
    $region66: #{_mlp_forward.1} parent=1 // pred_check
      _
    $region67: #{_mlp_forward.1} parent=1 // pred_check_branch
      %527 = sbr.rel (0) target = $region69
    $region68: #{_mlp_forward.1} parent=1 // pred_region
      _
    $region69: #{_mlp_forward.1} parent=1 // pred_fallthru
      _
    // Predicated region
    $region70: #{_mlp_forward.1} parent=1 // pred_check
      _
    $region71: #{_mlp_forward.1} parent=1 // pred_check_branch
      %529 = sbr.rel (0) target = $region73
    $region72: #{_mlp_forward.1} parent=1 // pred_region
      _
    $region73: #{_mlp_forward.1} parent=1 // pred_fallthru
      _
    %530 = vsyncpa [#allocation3], 1
    %531 = vsyncpa [#allocation5], 1

</llo_original>
